<compile_context>
chip_gen: v5e
topology: v5e:2x2
jax: 0.10.0
libtpu: 0.0.40
codegen_flags: <defaults>
</compile_context>

<pallas_src>
import functools

import jax
import jax.numpy as jnp
from jax.experimental import pallas as pl
from jax.experimental.pallas import tpu as pltpu


def _round_up(x, m):
    return (x + m - 1) // m * m


# ---------------------------------------------------------------- kernel ----

def _lora_mlp_kernel(
    x_ref,      # (tm, H)       bf16 token tile (constant over j)
    wgu_ref,    # (H, 2*tn)     bf16 fused dense [Wg_tile | Wu_tile]
    agu_ref,    # (H, 2*r)      bf16 fused LoRA-A [Ag | Au]        (constant)
    bgu_ref,    # (2*r, 2*tn)   bf16 block-diag [[Bg,0],[0,Bu]], scale folded
    wda_ref,    # (tn, H+128)   bf16 fused down [Wd_tile | Ad_tile padded]
    bdp_ref,    # (128, H)      bf16 Bd padded to 128 rows, scale folded
    o_ref,      # (tm, H)       output (x dtype)
    acc_ref,    # (tm, H+128)   f32 scratch: running down-proj accumulator
    xa_ref,     # (tm, 2*r)     bf16 scratch: hoisted x @ [Ag|Au]
    *,
    tn: int,
    hidden: int,
):
    j = pl.program_id(1)
    x = x_ref[...]

    @pl.when(j == 0)
    def _():
        acc_ref[...] = jnp.zeros_like(acc_ref)
        # LoRA-A projection is invariant along the I-reduction axis: hoist it.
        xa_ref[...] = jnp.dot(
            x, agu_ref[...], preferred_element_type=jnp.float32
        ).astype(xa_ref.dtype)

    # Fused gate/up dense projection + block-diagonal LoRA-B, f32 accumulation.
    gu = jnp.dot(x, wgu_ref[...], preferred_element_type=jnp.float32)
    gu = gu + jnp.dot(xa_ref[...], bgu_ref[...],
                      preferred_element_type=jnp.float32)

    gate = gu[:, :tn]
    up = gu[:, tn:]
    # SwiGLU in f32 (sigmoid goes to the EUP), bf16 feed for the down-proj MXU.
    h = ((gate * jax.nn.sigmoid(gate)) * up).astype(x.dtype)

    # Fused down-proj dense + (h @ Ad) in a single dot, accumulated over I.
    acc_ref[...] += jnp.dot(h, wda_ref[...], preferred_element_type=jnp.float32)

    @pl.when(j == pl.num_programs(1) - 1)
    def _():
        acc = acc_ref[...]
        dense = acc[:, :hidden]
        hd = acc[:, hidden:].astype(x.dtype)           # (tm, 128): h @ Ad (padded)
        out = dense + jnp.dot(hd, bdp_ref[...],
                              preferred_element_type=jnp.float32)
        o_ref[...] = out.astype(o_ref.dtype)


# -------------------------------------------------- per-generation defaults --

def _pick_defaults():
    """(tm, vmem_limit_bytes) per TPU generation.

    v5e/v6e (128 MiB physical VMEM): tm=768, ~100 MiB scoped limit.
    v7x     ( 64 MiB physical VMEM): tm=384, ~56 MiB scoped limit.
    """
    vmem_bytes = 64 << 20
    try:
        info = pltpu.get_tpu_info()
        for name in ("vmem_capacity_bytes", "vmem_size_bytes", "vmem_bytes"):
            v = getattr(info, name, None)
            if v:
                vmem_bytes = int(v)
                break
    except Exception:
        pass
    if vmem_bytes >= (96 << 20):
        return 768, 100 << 20
    return 384, 56 << 20


# ---------------------------------------------------------- weight prep ----

def prepare_params(params, *, lora_scale, tn=512, compute_dtype=jnp.bfloat16):
    """One-time weight fusion / scale folding / bf16 cast (keep out of the
    per-forward path). Weights are stored (in, out)."""
    (wg, ag, bg, wu, au, bu, wd, ad, bd) = params
    H, I = wg.shape
    r = ag.shape[1]
    assert r <= 128, "LoRA rank > 128 not supported by the fused down-proj"

    tn = min(tn, I)
    assert I % tn == 0, "intermediate size must be divisible by the I tile"
    assert tn == I or tn % 128 == 0, "I tile must be lane-aligned (128) or full"
    nI = I // tn

    c = lambda a: a.astype(compute_dtype)

    # Fused gate/up dense: per I-tile block j is [Wg[:, j-tile] | Wu[:, j-tile]].
    wgu = jnp.concatenate(
        [wg.reshape(H, nI, 1, tn), wu.reshape(H, nI, 1, tn)], axis=2
    ).reshape(H, 2 * I)

    # Fused LoRA-A.
    agu = jnp.concatenate([ag, au], axis=1)                      # (H, 2r)

    # Block-diagonal fused LoRA-B per I tile (scale folded in f32, then cast).
    bg_t = (lora_scale * bg).reshape(r, nI, tn)
    bu_t = (lora_scale * bu).reshape(r, nI, tn)
    z = jnp.zeros_like(bg_t)
    bgu = jnp.concatenate(
        [jnp.concatenate([bg_t, z], axis=-1),
         jnp.concatenate([z, bu_t], axis=-1)], axis=0
    ).reshape(2 * r, 2 * I)

    # Fused down-proj: [Wd | Ad padded to 128 cols], shape (I, H + 128).
    ad_pad = jnp.pad(ad, ((0, 0), (0, 128 - r)))
    wda = jnp.concatenate([wd, ad_pad], axis=1)

    # Bd padded to 128 rows (matching the padded Ad columns), scale folded.
    bdp = jnp.pad(lora_scale * bd, ((0, 128 - r), (0, 0)))

    return dict(
        wgu=c(wgu), agu=c(agu), bgu=c(bgu), wda=c(wda), bdp=c(bdp),
        hidden=H, inter=I, rank=r, tn=tn, n_i_tiles=nI,
        compute_dtype=compute_dtype,
    )


# --------------------------------------------------------------- wrapper ----

def lora_mlp(x, prepared, *, tm=None, vmem_limit_bytes=None):
    """x: (batch, seq, hidden). Returns (out,) matching MyModel.forward."""
    B, S, H = x.shape
    assert H == prepared["hidden"]
    I = prepared["inter"]
    r = prepared["rank"]
    tn = prepared["tn"]
    nI = prepared["n_i_tiles"]
    cdt = prepared["compute_dtype"]

    d_tm, d_vmem = _pick_defaults()
    if tm is None:
        tm = d_tm
    if vmem_limit_bytes is None:
        vmem_limit_bytes = d_vmem

    M = B * S
    tm = min(_round_up(tm, 16), _round_up(M, 16))   # bf16 packing tile = (16,128)
    Mp = _round_up(M, tm)

    x2d = x.reshape(M, H)
    if Mp != M:
        x2d = jnp.pad(x2d, ((0, Mp - M), (0, 0)))
    x2d = x2d.astype(cdt)

    # ---- advisory cost estimate ------------------------------------------
    flops = (2 * M * H * 2 * I                        # gate/up dense
             + 2 * M * I * H                          # down dense
             + 2 * M * H * 2 * r + 2 * M * r * 2 * I  # gate/up LoRA
             + 2 * M * I * r + 2 * M * r * H)         # down LoRA
    weight_bytes = sum(int(prepared[k].nbytes)
                       for k in ("wgu", "agu", "bgu", "wda", "bdp"))
    n_tok_tiles = Mp // tm
    cost = pl.CostEstimate(
        flops=int(flops),
        transcendentals=int(M * I),
        bytes_accessed=int(x2d.nbytes + M * H * x.dtype.itemsize
                           + n_tok_tiles * weight_bytes),
    )

    kernel = functools.partial(_lora_mlp_kernel, tn=tn, hidden=H)

    out2d = pl.pallas_call(
        kernel,
        out_shape=jax.ShapeDtypeStruct((Mp, H), x.dtype),
        grid_spec=pltpu.PrefetchScalarGridSpec(
            num_scalar_prefetch=0,
            # leading token axis: parallel (megacore); trailing I axis: reduction
            grid=(Mp // tm, nI),
            in_specs=[
                pl.BlockSpec((tm, H), lambda i, j: (i, 0)),          # x tile
                pl.BlockSpec((H, 2 * tn), lambda i, j: (0, j)),      # [Wg|Wu]
                pl.BlockSpec((H, 2 * r), lambda i, j: (0, 0)),       # [Ag|Au]
                pl.BlockSpec((2 * r, 2 * tn), lambda i, j: (0, j)),  # blkdiag B
                pl.BlockSpec((tn, H + 128), lambda i, j: (j, 0)),    # [Wd|Ad]
                pl.BlockSpec((128, H), lambda i, j: (0, 0)),         # Bd padded
            ],
            out_specs=pl.BlockSpec((tm, H), lambda i, j: (i, 0)),
            scratch_shapes=[
                pltpu.VMEM((tm, H + 128), jnp.float32),   # fused down accum
                pltpu.VMEM((tm, 2 * r), cdt),             # hoisted x @ [Ag|Au]
            ],
        ),
        compiler_params=pltpu.CompilerParams(
            dimension_semantics=("parallel", "arbitrary"),
            vmem_limit_bytes=int(vmem_limit_bytes),
        ),
        cost_estimate=cost,
    )(x2d, prepared["wgu"], prepared["agu"], prepared["bgu"],
      prepared["wda"], prepared["bdp"])

    return (out2d[:M].reshape(B, S, H),)


# --------------------------------------------------------------- helpers ----

def init_params(key, hidden, intermediate, rank, dtype=jnp.float32):
    """Synthetic weights. PyTorch nn.Linear stores (out, in); these are already
    transposed to (in, out) so the kernel does plain row-major matmuls."""
    ks = jax.random.split(key, 9)
    std = 0.02

    def w(k, shape):
        return (std * jax.random.normal(k, shape)).astype(dtype)

    wg = w(ks[0], (hidden, intermediate))
    ag = w(ks[1], (hidden, rank))
    bg = w(ks[2], (rank, intermediate))
    wu = w(ks[3], (hidden, intermediate))
    au = w(ks[4], (hidden, rank))
    bu = w(ks[5], (rank, intermediate))
    wd = w(ks[6], (intermediate, hidden))
    ad = w(ks[7], (intermediate, rank))
    bd = w(ks[8], (rank, hidden))
    return (wg, ag, bg, wu, au, bu, wd, ad, bd)


def reference(x, params, lora_scale, compute_dtype=jnp.bfloat16):
    """Mirrors the kernel's precision policy (bf16 operands, f32 accumulation)."""
    (wg, ag, bg, wu, au, bu, wd, ad, bd) = params
    c = lambda a: a.astype(compute_dtype)
    dot = lambda a, b: jnp.dot(c(a), c(b), preferred_element_type=jnp.float32)
    B, S, H = x.shape
    x2 = x.reshape(-1, H)
    gate = dot(x2, wg) + dot(dot(x2, ag), lora_scale * bg)
    up = dot(x2, wu) + dot(dot(x2, au), lora_scale * bu)
    h = (gate * jax.nn.sigmoid(gate)) * up
    out = dot(h, wd) + dot(dot(h, ad), lora_scale * bd)
    return out.reshape(B, S, H).astype(x.dtype)


if __name__ == "__main__":
    # Small config consistent with a Mistral MLP + LoRA (rank 8, alpha 16).
    batch, seq, hidden, intermediate, rank = 2, 8, 32, 64, 8
    lora_alpha = 16.0
    lora_scale = lora_alpha / rank  # LoRA dropout is identity at eval time

    key = jax.random.PRNGKey(0)
    kx, kp = jax.random.split(key)
    x = jax.random.normal(kx, (batch, seq, hidden), dtype=jnp.float32)
    params = init_params(kp, hidden, intermediate, rank)

    prepared = prepare_params(params, lora_scale=lora_scale)
    (out,) = lora_mlp(x, prepared)
    out = jax.block_until_ready(out)

    ref = reference(x, params, lora_scale)
    assert out.shape == (batch, seq, hidden)
    assert jnp.allclose(out, ref, atol=1e-3, rtol=2e-2), "mismatch vs. reference"

    print("KERNEL_OK")
</pallas_src>

<mosaic_0001>
module attributes {stable_mosaic.version = 11 : i64} {
  func.func @_lora_mlp_kernel(%arg0: i32, %arg1: i32, %arg2: memref<16x32xbf16, #tpu.memory_space<vmem>>, %arg3: memref<32x128xbf16, #tpu.memory_space<vmem>>, %arg4: memref<32x16xbf16, #tpu.memory_space<vmem>>, %arg5: memref<16x128xbf16, #tpu.memory_space<vmem>>, %arg6: memref<64x160xbf16, #tpu.memory_space<vmem>>, %arg7: memref<128x32xbf16, #tpu.memory_space<vmem>>, %arg8: memref<16x32xf32, #tpu.memory_space<vmem>>, %arg9: memref<16x160xf32, #tpu.memory_space<vmem>>, %arg10: memref<16x16xbf16, #tpu.memory_space<vmem>>) attributes {dimension_semantics = [#tpu.dimension_semantics<parallel>, #tpu.dimension_semantics<arbitrary>], iteration_bounds = array<i64: 1, 1>, scalar_prefetch = 0 : i64, scratch_operands = 2 : i64, tpu.core_type = #tpu.core_type<tc>, window_params = [{transform_indices = @transform_0, window_bounds = array<i64: 16, 32>}, {transform_indices = @transform_1, window_bounds = array<i64: 32, 128>}, {pipeline_mode = #tpu.pipeline_mode<synchronous>, transform_indices = @transform_2, window_bounds = array<i64: 32, 16>}, {transform_indices = @transform_3, window_bounds = array<i64: 16, 128>}, {transform_indices = @transform_4, window_bounds = array<i64: 64, 160>}, {pipeline_mode = #tpu.pipeline_mode<synchronous>, transform_indices = @transform_5, window_bounds = array<i64: 128, 32>}, {transform_indices = @transform_6, window_bounds = array<i64: 16, 32>}]} {
    %c0 = arith.constant 0 : index
    %c0_0 = arith.constant 0 : index
    %0 = vector.load %arg2[%c0, %c0_0] : memref<16x32xbf16, #tpu.memory_space<vmem>>, vector<16x32xbf16>
    %c0_i32 = arith.constant 0 : i32
    %1 = arith.cmpi eq, %arg1, %c0_i32 : i32
    %2 = arith.extui %1 : i1 to i32
    %c0_i32_1 = arith.constant 0 : i32
    %3 = arith.cmpi ne, %2, %c0_i32_1 : i32
    scf.if %3 {
      %cst_19 = arith.constant 0.000000e+00 : f32
      %28 = vector.broadcast %cst_19 : f32 to vector<16x160xf32>
      %c0_20 = arith.constant 0 : index
      %c0_21 = arith.constant 0 : index
      %29 = vector.load %arg9[%c0_20, %c0_21] : memref<16x160xf32, #tpu.memory_space<vmem>>, vector<16x160xf32>
      tpu.vector_store %arg9[%c0_20, %c0_21], %28 {strides = array<i32>} : memref<16x160xf32, #tpu.memory_space<vmem>>, vector<16x160xf32>,
      %c0_22 = arith.constant 0 : index
      %c0_23 = arith.constant 0 : index
      %30 = vector.load %arg4[%c0_22, %c0_23] : memref<32x16xbf16, #tpu.memory_space<vmem>>, vector<32x16xbf16>
      %cst_24 = arith.constant dense<0.000000e+00> : vector<16x16xf32>
      %31 = tpu.matmul %0, %30, %cst_24 {dimension_numbers = #tpu.dot_dimension_numbers<[1], [0], [0], [1], [0, 0, 1, 1], [], []>} : vector<16x32xbf16>, vector<32x16xbf16>, vector<16x16xf32> -> vector<16x16xf32>
      %32 = arith.truncf %31 : vector<16x16xf32> to vector<16x16xbf16>
      %c0_25 = arith.constant 0 : index
      %c0_26 = arith.constant 0 : index
      %33 = vector.load %arg10[%c0_25, %c0_26] : memref<16x16xbf16, #tpu.memory_space<vmem>>, vector<16x16xbf16>
      tpu.vector_store %arg10[%c0_25, %c0_26], %32 {strides = array<i32>} : memref<16x16xbf16, #tpu.memory_space<vmem>>, vector<16x16xbf16>,
    } else {
    }
    %c0_2 = arith.constant 0 : index
    %c0_3 = arith.constant 0 : index
    %4 = vector.load %arg3[%c0_2, %c0_3] : memref<32x128xbf16, #tpu.memory_space<vmem>>, vector<32x128xbf16>
    %cst = arith.constant dense<0.000000e+00> : vector<16x128xf32>
    %5 = tpu.matmul %0, %4, %cst {dimension_numbers = #tpu.dot_dimension_numbers<[1], [0], [0], [1], [0, 0, 1, 1], [], []>} : vector<16x32xbf16>, vector<32x128xbf16>, vector<16x128xf32> -> vector<16x128xf32>
    %c0_4 = arith.constant 0 : index
    %c0_5 = arith.constant 0 : index
    %6 = vector.load %arg10[%c0_4, %c0_5] : memref<16x16xbf16, #tpu.memory_space<vmem>>, vector<16x16xbf16>
    %c0_6 = arith.constant 0 : index
    %c0_7 = arith.constant 0 : index
    %7 = vector.load %arg5[%c0_6, %c0_7] : memref<16x128xbf16, #tpu.memory_space<vmem>>, vector<16x128xbf16>
    %cst_8 = arith.constant dense<0.000000e+00> : vector<16x128xf32>
    %8 = tpu.matmul %6, %7, %cst_8 {dimension_numbers = #tpu.dot_dimension_numbers<[1], [0], [0], [1], [0, 0, 1, 1], [], []>} : vector<16x16xbf16>, vector<16x128xbf16>, vector<16x128xf32> -> vector<16x128xf32>
    %9 = arith.addf %5, %8 : vector<16x128xf32>
    %10 = vector.extract_strided_slice %9 {offsets = [0, 0], sizes = [16, 64], strides = [1, 1]} : vector<16x128xf32> to vector<16x64xf32>
    %11 = vector.extract_strided_slice %9 {offsets = [0, 64], sizes = [16, 64], strides = [1, 1]} : vector<16x128xf32> to vector<16x64xf32>
    %12 = arith.negf %10 : vector<16x64xf32>
    %13 = math.exp %12 : vector<16x64xf32>
    %cst_9 = arith.constant 1.000000e+00 : f32
    %14 = vector.broadcast %cst_9 : f32 to vector<16x64xf32>
    %15 = arith.addf %14, %13 : vector<16x64xf32>
    %16 = arith.divf %14, %15 : vector<16x64xf32>
    %17 = arith.mulf %10, %16 : vector<16x64xf32>
    %18 = arith.mulf %17, %11 : vector<16x64xf32>
    %19 = arith.truncf %18 : vector<16x64xf32> to vector<16x64xbf16>
    %c0_10 = arith.constant 0 : index
    %c0_11 = arith.constant 0 : index
    %20 = vector.load %arg9[%c0_10, %c0_11] : memref<16x160xf32, #tpu.memory_space<vmem>>, vector<16x160xf32>
    %c0_12 = arith.constant 0 : index
    %c0_13 = arith.constant 0 : index
    %21 = vector.load %arg6[%c0_12, %c0_13] : memref<64x160xbf16, #tpu.memory_space<vmem>>, vector<64x160xbf16>
    %cst_14 = arith.constant dense<0.000000e+00> : vector<16x160xf32>
    %22 = tpu.matmul %19, %21, %cst_14 {dimension_numbers = #tpu.dot_dimension_numbers<[1], [0], [0], [1], [0, 0, 1, 1], [], []>} : vector<16x64xbf16>, vector<64x160xbf16>, vector<16x160xf32> -> vector<16x160xf32>
    %23 = arith.addf %20, %22 : vector<16x160xf32>
    %c0_15 = arith.constant 0 : index
    %c0_16 = arith.constant 0 : index
    %24 = vector.load %arg9[%c0_15, %c0_16] : memref<16x160xf32, #tpu.memory_space<vmem>>, vector<16x160xf32>
    tpu.vector_store %arg9[%c0_15, %c0_16], %23 {strides = array<i32>} : memref<16x160xf32, #tpu.memory_space<vmem>>, vector<16x160xf32>,
    %c0_i32_17 = arith.constant 0 : i32
    %25 = arith.cmpi eq, %arg1, %c0_i32_17 : i32
    %26 = arith.extui %25 : i1 to i32
    %c0_i32_18 = arith.constant 0 : i32
    %27 = arith.cmpi ne, %26, %c0_i32_18 : i32
    scf.if %27 {
      %c0_19 = arith.constant 0 : index
      %c0_20 = arith.constant 0 : index
      %28 = vector.load %arg9[%c0_19, %c0_20] : memref<16x160xf32, #tpu.memory_space<vmem>>, vector<16x160xf32>
      %29 = vector.extract_strided_slice %28 {offsets = [0, 0], sizes = [16, 32], strides = [1, 1]} : vector<16x160xf32> to vector<16x32xf32>
      %30 = vector.extract_strided_slice %28 {offsets = [0, 32], sizes = [16, 128], strides = [1, 1]} : vector<16x160xf32> to vector<16x128xf32>
      %31 = arith.truncf %30 : vector<16x128xf32> to vector<16x128xbf16>
      %c0_21 = arith.constant 0 : index
      %c0_22 = arith.constant 0 : index
      %32 = vector.load %arg7[%c0_21, %c0_22] : memref<128x32xbf16, #tpu.memory_space<vmem>>, vector<128x32xbf16>
      %cst_23 = arith.constant dense<0.000000e+00> : vector<16x32xf32>
      %33 = tpu.matmul %31, %32, %cst_23 {dimension_numbers = #tpu.dot_dimension_numbers<[1], [0], [0], [1], [0, 0, 1, 1], [], []>} : vector<16x128xbf16>, vector<128x32xbf16>, vector<16x32xf32> -> vector<16x32xf32>
      %34 = arith.addf %29, %33 : vector<16x32xf32>
      %c0_24 = arith.constant 0 : index
      %c0_25 = arith.constant 0 : index
      %35 = vector.load %arg8[%c0_24, %c0_25] : memref<16x32xf32, #tpu.memory_space<vmem>>, vector<16x32xf32>
      tpu.vector_store %arg8[%c0_24, %c0_25], %34 {strides = array<i32>} : memref<16x32xf32, #tpu.memory_space<vmem>>, vector<16x32xf32>,
    } else {
    }
    return
  }
  func.func @transform_0(%arg0: i32, %arg1: i32) -> (i32, i32) {
    %c0_i32 = arith.constant 0 : i32
    %c0_i32_0 = arith.constant 0 : i32
    return %arg0, %c0_i32 : i32, i32
  }
  func.func @transform_1(%arg0: i32, %arg1: i32) -> (i32, i32) {
    %c0_i32 = arith.constant 0 : i32
    %c0_i32_0 = arith.constant 0 : i32
    return %c0_i32, %arg1 : i32, i32
  }
  func.func @transform_2(%arg0: i32, %arg1: i32) -> (i32, i32) {
    %c0_i32 = arith.constant 0 : i32
    %c0_i32_0 = arith.constant 0 : i32
    %c0_i32_1 = arith.constant 0 : i32
    return %c0_i32, %c0_i32_0 : i32, i32
  }
  func.func @transform_3(%arg0: i32, %arg1: i32) -> (i32, i32) {
    %c0_i32 = arith.constant 0 : i32
    %c0_i32_0 = arith.constant 0 : i32
    return %c0_i32, %arg1 : i32, i32
  }
  func.func @transform_4(%arg0: i32, %arg1: i32) -> (i32, i32) {
    %c0_i32 = arith.constant 0 : i32
    %c0_i32_0 = arith.constant 0 : i32
    return %arg1, %c0_i32 : i32, i32
  }
  func.func @transform_5(%arg0: i32, %arg1: i32) -> (i32, i32) {
    %c0_i32 = arith.constant 0 : i32
    %c0_i32_0 = arith.constant 0 : i32
    %c0_i32_1 = arith.constant 0 : i32
    return %c0_i32, %c0_i32_0 : i32, i32
  }
  func.func @transform_6(%arg0: i32, %arg1: i32) -> (i32, i32) {
    %c0_i32 = arith.constant 0 : i32
    %c0_i32_0 = arith.constant 0 : i32
    return %arg0, %c0_i32 : i32, i32
  }
}

</mosaic_0001>

<llo_original>
// kernel: tpu_custom_call.1
$region0: #{tpu_custom_call.1}
  #allocation0 [shape = 'u32[]', space=smem, size = 0x4, offset = 0x4, fixed_abs, tag = 'smem constant byte address 0x4 - core index']
  #allocation1 [shape = 'u32[72,128]{1,0:T(1,128)}', space=vmem, size = 0x9000, scoped, tag = 'internal scratch']
  #allocation2 [shape = 'f32[16,160]{1,0:T(8,128)}', space=vmem, size = 0x4000, scoped, tag = 'scratch operand']
  #allocation3 [shape = 'bf16[16,16]{1,0:T(8,128)(2,1)}', space=vmem, size = 0x1000, scoped, tag = 'scratch operand']
  %s0 = inlined_call_operand.vmem [shape: bf16[16,32], index: 0, kind: input, shape index: {}]
  %s1 = inlined_call_operand.vmem [shape: bf16[32,128], index: 1, kind: input, shape index: {}]
  %s2 = inlined_call_operand.vmem [shape: bf16[32,16], index: 2, kind: input, shape index: {}]
  %s3 = inlined_call_operand.hbm [shape: bf16[16,128], index: 3, kind: input, shape index: {}]
  %s4 = inlined_call_operand.vmem [shape: bf16[64,160], index: 4, kind: input, shape index: {}]
  %s5 = inlined_call_operand.vmem [shape: bf16[128,32], index: 5, kind: input, shape index: {}]
  %s6 = inlined_call_operand.hbm [shape: f32[16,32], index: 6, kind: output, shape index: {}]
  %s7 = sld [smem:[#allocation0]]
  $region46: #{tpu_custom_call.1} parent=0
    _
  %s9 = ssub.s32 1, %s7
  %s10 = scalar_select 0, %s9, %s7
  $region1: #{tpu_custom_call.1} parent=0
    #allocation4 [shape = 'u8[4096]{0}', space=vmem, size = 0x1000, scoped, tag = 'input window, operand 3, single buffered']
    #allocation5 [shape = 's32[1]{0}', space=sflag, size = 0x4, scoped, tag = 'scoped memory for tpu_custom_call.1']
    #allocation6 [shape = 's32[1]{0}', space=sflag, size = 0x4, scoped, tag = 'scoped memory for tpu_custom_call.1']
    #allocation7 [shape = 'u8[8192]{0}', space=vmem, size = 0x2000, scoped, tag = 'output window, operand 0, single buffered']
    %11 = vsyncpa [#allocation5], 0
    %12 = vsyncpa [#allocation6], 0
    // Predicated region
    $region2: #{tpu_custom_call.1} parent=1 // pred_check
      _
    $region3: #{tpu_custom_call.1} parent=1 // pred_check_branch
      %14 = sbr.rel (0) target = $region5
    $region4: #{tpu_custom_call.1} parent=1 // pred_region
      _
    $region5: #{tpu_custom_call.1} parent=1 // pred_fallthru
      _
    // Predicated region
    $region6: #{tpu_custom_call.1} parent=1 // pred_check
      _
    $region7: #{tpu_custom_call.1} parent=1 // pred_check_branch
      %16 = sbr.rel (0) target = $region9
    $region8: #{tpu_custom_call.1} parent=1 // pred_region
      _
    $region9: #{tpu_custom_call.1} parent=1 // pred_fallthru
      _
    // Predicated region
    $region10: #{tpu_custom_call.1} parent=1 // pred_check
      _
    $region11: #{tpu_custom_call.1} parent=1 // pred_check_branch
      %18 = sbr.rel (0) target = $region13
    $region12: #{tpu_custom_call.1} parent=1 // pred_region
      _
    $region13: #{tpu_custom_call.1} parent=1 // pred_fallthru
      _
    // Predicated region
    $region14: #{tpu_custom_call.1} parent=1 // pred_check
      _
    $region15: #{tpu_custom_call.1} parent=1 // pred_check_branch
      %20 = sbr.rel (0) target = $region17
    $region16: #{tpu_custom_call.1} parent=1 // pred_region
      %22 = vsyncadd [#allocation5], 0
      %s23 = sshll.u32 %s3, 4
      %s24 = int_to_ptr.hbm [resolvable:$true] %s23
      %s25 = sshll.u32 [#allocation4], 4
      %s26 = int_to_ptr.vmem [resolvable:$true] %s25
      %31 = dma.hbm_to_vmem [thread:$0]  %s24, 128, %s26, [#allocation5], 64, 64, 4
    $region17: #{tpu_custom_call.1} parent=1 // pred_fallthru
      _
    // Predicated region
    $region18: #{tpu_custom_call.1} parent=1 // pred_check
      _
    $region19: #{tpu_custom_call.1} parent=1 // pred_check_branch
      %33 = sbr.rel (0) target = $region21
    $region20: #{tpu_custom_call.1} parent=1 // pred_region
      _
    $region21: #{tpu_custom_call.1} parent=1 // pred_fallthru
      _
    // Predicated region
    $region22: #{tpu_custom_call.1} parent=1 // pred_check
      _
    $region23: #{tpu_custom_call.1} parent=1 // pred_check_branch
      %35 = sbr.rel (0) target = $region25
    $region24: #{tpu_custom_call.1} parent=1 // pred_region
      _
    $region25: #{tpu_custom_call.1} parent=1 // pred_fallthru
      _
    // Predicated region
    $region26: #{tpu_custom_call.1} parent=1 // pred_check
      _
    $region27: #{tpu_custom_call.1} parent=1 // pred_check_branch
      %37 = sbr.rel (0) target = $region29
    $region28: #{tpu_custom_call.1} parent=1 // pred_region
      %39 = dma.done [#allocation5], 128
    $region29: #{tpu_custom_call.1} parent=1 // pred_fallthru
      _
    %v41 = vld [vmem:[%s0] sm:$0xf]
    %v42 = vld [vmem:[%s0 + $0x4] sm:$0xf]
    %p43 = scmp.eq.s32.totalorder 0, 0
    // Predicated region
    $region30: #{tpu_custom_call.1} parent=1 // pred_check
      %p44 = pneg %p43
    $region31: #{tpu_custom_call.1} parent=1 // pred_check_branch
      %46 = sbr.rel (%p44) target = $region33
    $region32: #{tpu_custom_call.1} parent=1 // pred_region
      %47 = vst [vmem:[#allocation2] sm:$0xff] 0.0
      %vm48 = vcmask 261120
      %49 = vst.msk [vmem:[#allocation2 + $0x8] sm:$0xff] %vm48, 0.0
      %50 = vst [vmem:[#allocation2 + $0x10] sm:$0xff] 0.0
      %51 = vst.msk [vmem:[#allocation2 + $0x18] sm:$0xff] %vm48, 0.0
      %v52 = vld [vmem:[%s2] sm:$0xf]
      %v53 = vld [vmem:[%s2 + $0x4] sm:$0xf]
      %v54 = vld [vmem:[%s2 + $0x8] sm:$0xf]
      %v55 = vld [vmem:[%s2 + $0xc] sm:$0xf]
      %v58 = vunpack.c.l.b16 %v41
      %v59 = vunpack.c.l.b16 %v42
      %v60 = vpack.c.b16 %v59, %v58
      %v65 = vunpack.c.l.b16 %v52
      %v66 = vunpack.c.l.b16 %v53
      %v67 = vunpack.c.l.b16 %v54
      %v68 = vunpack.c.l.b16 %v55
      %v69 = vpack.c.b16 %v66, %v65
      %v70 = vpack.c.b16 %v68, %v67
      %v74 = vsel %vm48, %v60, 0
      %76 = vmatpush.bf16.msra.mxu0 0
      %77 = vmatpush.bf16.msra.mxu0 0
      %78 = vmatpush.bf16.msra.mxu0 0
      %79 = vmatpush.bf16.msra.mxu0 0
      %80 = vmatpush.bf16.msra.mxu0 0
      %81 = vmatpush.bf16.msra.mxu0 0
      %82 = vmatpush.bf16.msra.mxu0 %v70
      %83 = vmatpush.bf16.msra.mxu0 %v69
      %84 = vmatmul.bf16.gmra.mxu0 %v74
      %v85 = vpop.f32.mrf.mxu0
      %v86 = vadd.f32 0.0, %v85
      %v87 = vpop.f32.mrf.mxu0
      %v88 = vadd.f32 0.0, %v87
      %89 = vdwg.mxu0
      %v90 = vpack.c.bf16 %v86, %v86
      %v91 = vpack.c.bf16 %v88, %v88
      %vm92 = vcmask 125952
      %93 = vst.msk [vmem:[#allocation3] sm:$0xf] %vm92, %v90
      %94 = vst.msk [vmem:[#allocation3 + $0x4] sm:$0xf] %vm92, %v91
    $region33: #{tpu_custom_call.1} parent=1 // pred_fallthru
      _
    %v95 = vld [vmem:[%s1] sm:$0xf]
    %v96 = vld [vmem:[%s1 + $0x4] sm:$0xf]
    %v97 = vld [vmem:[%s1 + $0x8] sm:$0xf]
    %v98 = vld [vmem:[%s1 + $0xc] sm:$0xf]
    %v99 = vld [vmem:[#allocation3] sm:$0xf]
    %v100 = vld [vmem:[#allocation3 + $0x4] sm:$0xf]
    %v101 = vld [vmem:[#allocation4] sm:$0xf]
    %v102 = vld [vmem:[#allocation4 + $0x4] sm:$0xf]
    %v105 = vunpack.c.l.b16 %v99
    %v106 = vunpack.c.l.b16 %v100
    %v107 = vpack.c.b16 %v106, %v105
    %v110 = vunpack.c.l.b16 %v101
    %v111 = vunpack.c.l.b16 %v102
    %v112 = vpack.c.b16 %v111, %v110
    %vm114 = vcmask 130048
    %v116 = vsel %vm114, %v107, 0
    %118 = vmatpush.bf16.msra.mxu0 0
    %119 = vmatpush.bf16.msra.mxu0 0
    %120 = vmatpush.bf16.msra.mxu0 0
    %121 = vmatpush.bf16.msra.mxu0 0
    %122 = vmatpush.bf16.msra.mxu0 0
    %123 = vmatpush.bf16.msra.mxu0 0
    %124 = vmatpush.bf16.msra.mxu0 0
    %125 = vmatpush.bf16.msra.mxu0 %v112
    %126 = vmatmul.bf16.gmra.mxu0 %v116
    %v127 = vpop.f32.mrf.mxu0
    %v128 = vadd.f32 0.0, %v127
    %v129 = vpop.f32.mrf.mxu0
    %v130 = vadd.f32 0.0, %v129
    %131 = vdwg.mxu0
    %v134 = vunpack.c.l.b16 %v41
    %v135 = vunpack.c.l.b16 %v42
    %v136 = vpack.c.b16 %v135, %v134
    %v141 = vunpack.c.l.b16 %v95
    %v142 = vunpack.c.l.b16 %v96
    %v143 = vunpack.c.l.b16 %v97
    %v144 = vunpack.c.l.b16 %v98
    %v145 = vpack.c.b16 %v142, %v141
    %v146 = vpack.c.b16 %v144, %v143
    %vm149 = vcmask 261120
    %v151 = vsel %vm149, %v136, 0
    %153 = vmatpush.bf16.msra.mxu0 0
    %154 = vmatpush.bf16.msra.mxu0 0
    %155 = vmatpush.bf16.msra.mxu0 0
    %156 = vmatpush.bf16.msra.mxu0 0
    %157 = vmatpush.bf16.msra.mxu0 0
    %158 = vmatpush.bf16.msra.mxu0 0
    %159 = vmatpush.bf16.msra.mxu0 %v146
    %160 = vmatpush.bf16.msra.mxu0 %v145
    %161 = vmatmul.bf16.gmra.mxu0 %v151
    %v162 = vpop.f32.mrf.mxu0
    %v163 = vadd.f32 %v128, %v162
    %v164 = vpop.f32.mrf.mxu0
    %v165 = vadd.f32 %v130, %v164
    %166 = vdwg.mxu0
    %v167 = vxor.u32 %v163, 2147483648
    %v168 = vxor.u32 %v165, 2147483648
    %v169 = vmul.f32 %v167, 1.442695
    %v170 = vpow.pop %v169
    %v171 = vmul.f32 %v168, 1.442695
    %v172 = vpow.pop %v171
    %v173 = vadd.f32 %v170, 1.0
    %v174 = vadd.f32 %v172, 1.0
    %v175 = vrcp.pop %v173
    %v176 = vmul.f32 %v173, %v175
    %v177 = vsub.f32 1.0, %v176
    %v178 = vmul.f32 %v175, %v177
    %v179 = vadd.f32 %v175, %v178
    %vm180 = vweird.f32 %v173
    %vm181 = vweird.f32 %v175
    %vm182 = vmor %vm180, %vm181
    %v183 = vsel %vm182, %v175, %v179
    %v184 = vand.u32 2147483647, %v173
    %vm185 = vcmp.eq.f32.partialorder %v184, 8.507059e+37
    %v186 = vand.u32 %v173, 2147483648
    %v187 = vor.u32 1.1754944e-38, %v186
    %v188 = vsel %vm185, %v187, %v183
    %v189 = vmul.f32 1.0, %v188
    %v190 = vrcp.pop %v174
    %v191 = vmul.f32 %v174, %v190
    %v192 = vsub.f32 1.0, %v191
    %v193 = vmul.f32 %v190, %v192
    %v194 = vadd.f32 %v190, %v193
    %vm195 = vweird.f32 %v174
    %vm196 = vweird.f32 %v190
    %vm197 = vmor %vm195, %vm196
    %v198 = vsel %vm197, %v190, %v194
    %v199 = vand.u32 2147483647, %v174
    %vm200 = vcmp.eq.f32.partialorder %v199, 8.507059e+37
    %v201 = vand.u32 %v174, 2147483648
    %v202 = vor.u32 1.1754944e-38, %v201
    %v203 = vsel %vm200, %v202, %v198
    %v204 = vmul.f32 1.0, %v203
    %v205 = vmul.f32 %v163, %v189
    %v206 = vmul.f32 %v165, %v204
    %209 = vrot.lane.b32.xlu0 %v163, 64
    %v210 = vpop.permute.xlu0 %209
    %211 = vrot.lane.b32.xlu0 %v165, 64
    %v212 = vpop.permute.xlu0 %211
    %v215 = vmul.f32 %v205, %v210
    %v216 = vmul.f32 %v206, %v212
    %v217 = vpack.c.bf16 %v216, %v215
    %v218 = vld [vmem:[#allocation2] sm:$0xff]
    %v219 = vld [vmem:[#allocation2 + $0x8] sm:$0xff]
    %v220 = vld [vmem:[#allocation2 + $0x10] sm:$0xff]
    %v221 = vld [vmem:[#allocation2 + $0x18] sm:$0xff]
    %v222 = vld [vmem:[%s4] sm:$0xff]
    %v223 = vld [vmem:[%s4 + $0x8] sm:$0xff]
    %v224 = vld [vmem:[%s4 + $0x10] sm:$0xff]
    %v225 = vld [vmem:[%s4 + $0x18] sm:$0xff]
    %v226 = vld [vmem:[%s4 + $0x20] sm:$0xff]
    %v227 = vld [vmem:[%s4 + $0x28] sm:$0xff]
    %v228 = vld [vmem:[%s4 + $0x30] sm:$0xff]
    %v229 = vld [vmem:[%s4 + $0x38] sm:$0xff]
    %v238 = vunpack.c.l.b16 %v222
    %v239 = vunpack.c.h.b16 %v222
    %v240 = vunpack.c.l.b16 %v223
    %v241 = vunpack.c.h.b16 %v223
    %v242 = vunpack.c.l.b16 %v224
    %v243 = vunpack.c.h.b16 %v224
    %v244 = vunpack.c.l.b16 %v225
    %v245 = vunpack.c.h.b16 %v225
    %v246 = vunpack.c.l.b16 %v226
    %v247 = vunpack.c.h.b16 %v226
    %v248 = vunpack.c.l.b16 %v227
    %v249 = vunpack.c.h.b16 %v227
    %v250 = vunpack.c.l.b16 %v228
    %v251 = vunpack.c.h.b16 %v228
    %v252 = vunpack.c.l.b16 %v229
    %v253 = vunpack.c.h.b16 %v229
    %v254 = vpack.c.b16 %v240, %v238
    %v255 = vpack.c.b16 %v241, %v239
    %v256 = vpack.c.b16 %v244, %v242
    %v257 = vpack.c.b16 %v245, %v243
    %v258 = vpack.c.b16 %v248, %v246
    %v259 = vpack.c.b16 %v249, %v247
    %v260 = vpack.c.b16 %v252, %v250
    %v261 = vpack.c.b16 %v253, %v251
    %vm270 = vcmask 523264
    %v272 = vsel %vm270, %v217, 0
    %274 = vmatpush.bf16.msra.mxu0 0
    %275 = vmatpush.bf16.msra.mxu0 0
    %276 = vmatpush.bf16.msra.mxu0 0
    %277 = vmatpush.bf16.msra.mxu0 0
    %278 = vmatpush.bf16.msra.mxu0 %v260
    %279 = vmatpush.bf16.msra.mxu0 %v258
    %280 = vmatpush.bf16.msra.mxu0 %v256
    %281 = vmatpush.bf16.msra.mxu0 %v254
    %282 = vmatmul.bf16.gmra.mxu0 %v272
    %v283 = vpop.f32.mrf.mxu0
    %v284 = vadd.f32 0.0, %v283
    %v285 = vpop.f32.mrf.mxu0
    %v286 = vadd.f32 0.0, %v285
    %287 = vdwg.mxu0
    %288 = vmatpush.bf16.msra.mxu0 0
    %289 = vmatpush.bf16.msra.mxu0 0
    %290 = vmatpush.bf16.msra.mxu0 0
    %291 = vmatpush.bf16.msra.mxu0 0
    %292 = vmatpush.bf16.msra.mxu0 %v261
    %293 = vmatpush.bf16.msra.mxu0 %v259
    %294 = vmatpush.bf16.msra.mxu0 %v257
    %295 = vmatpush.bf16.msra.mxu0 %v255
    %296 = vmatmul.bf16.gmra.mxu0 %v272
    %v297 = vpop.f32.mrf.mxu0
    %v298 = vadd.f32 0.0, %v297
    %v299 = vpop.f32.mrf.mxu0
    %v300 = vadd.f32 0.0, %v299
    %301 = vdwg.mxu0
    %v302 = vadd.f32 %v218, %v284
    %v303 = vadd.f32 %v219, %v298
    %v304 = vadd.f32 %v220, %v286
    %v305 = vadd.f32 %v221, %v300
    %306 = vst [vmem:[#allocation2] sm:$0xff] %v302
    %307 = vst.msk [vmem:[#allocation2 + $0x8] sm:$0xff] %vm149, %v303
    %308 = vst [vmem:[#allocation2 + $0x10] sm:$0xff] %v304
    %309 = vst.msk [vmem:[#allocation2 + $0x18] sm:$0xff] %vm149, %v305
    // Predicated region
    $region34: #{tpu_custom_call.1} parent=1 // pred_check
      %p310 = pneg %p43
    $region35: #{tpu_custom_call.1} parent=1 // pred_check_branch
      %312 = sbr.rel (%p310) target = $region37
    $region36: #{tpu_custom_call.1} parent=1 // pred_region
      %v313 = vld [vmem:[#allocation2] sm:$0xff]
      %v314 = vld [vmem:[#allocation2 + $0x8] sm:$0xff]
      %v315 = vld [vmem:[#allocation2 + $0x10] sm:$0xff]
      %v316 = vld [vmem:[#allocation2 + $0x18] sm:$0xff]
      %v317 = vpack.c.bf16 %v315, %v313
      %v318 = vpack.c.bf16 %v316, %v314
      %v319 = vld [vmem:[%s5] sm:$0xf]
      %v320 = vld [vmem:[%s5 + $0x4] sm:$0xf]
      %v321 = vld [vmem:[%s5 + $0x8] sm:$0xf]
      %v322 = vld [vmem:[%s5 + $0xc] sm:$0xf]
      %v323 = vld [vmem:[%s5 + $0x10] sm:$0xf]
      %v324 = vld [vmem:[%s5 + $0x14] sm:$0xf]
      %v325 = vld [vmem:[%s5 + $0x18] sm:$0xf]
      %v326 = vld [vmem:[%s5 + $0x1c] sm:$0xf]
      %v327 = vld [vmem:[%s5 + $0x20] sm:$0xf]
      %v328 = vld [vmem:[%s5 + $0x24] sm:$0xf]
      %v329 = vld [vmem:[%s5 + $0x28] sm:$0xf]
      %v330 = vld [vmem:[%s5 + $0x2c] sm:$0xf]
      %v331 = vld [vmem:[%s5 + $0x30] sm:$0xf]
      %v332 = vld [vmem:[%s5 + $0x34] sm:$0xf]
      %v333 = vld [vmem:[%s5 + $0x38] sm:$0xf]
      %v334 = vld [vmem:[%s5 + $0x3c] sm:$0xf]
      %337 = vrot.lane.b32.xlu0 %v317, 96
      %v338 = vpop.permute.xlu0 %337
      %339 = vrot.lane.b32.xlu0 %v318, 96
      %v340 = vpop.permute.xlu0 %339
      %vm341 = vcmask 785408
      %v342 = vsel %vm341, %v338, %v340
      %v360 = vunpack.c.l.b16 %v319
      %v361 = vunpack.c.l.b16 %v320
      %v362 = vunpack.c.l.b16 %v321
      %v363 = vunpack.c.l.b16 %v322
      %v364 = vunpack.c.l.b16 %v323
      %v365 = vunpack.c.l.b16 %v324
      %v366 = vunpack.c.l.b16 %v325
      %v367 = vunpack.c.l.b16 %v326
      %v368 = vunpack.c.l.b16 %v327
      %v369 = vunpack.c.l.b16 %v328
      %v370 = vunpack.c.l.b16 %v329
      %v371 = vunpack.c.l.b16 %v330
      %v372 = vunpack.c.l.b16 %v331
      %v373 = vunpack.c.l.b16 %v332
      %v374 = vunpack.c.l.b16 %v333
      %v375 = vunpack.c.l.b16 %v334
      %v376 = vpack.c.b16 %v361, %v360
      %v377 = vpack.c.b16 %v363, %v362
      %v378 = vpack.c.b16 %v365, %v364
      %v379 = vpack.c.b16 %v367, %v366
      %v380 = vpack.c.b16 %v369, %v368
      %v381 = vpack.c.b16 %v371, %v370
      %v382 = vpack.c.b16 %v373, %v372
      %v383 = vpack.c.b16 %v375, %v374
      %392 = vmatpush.bf16.msra.mxu0 %v383
      %393 = vmatpush.bf16.msra.mxu0 %v382
      %394 = vmatpush.bf16.msra.mxu0 %v381
      %395 = vmatpush.bf16.msra.mxu0 %v380
      %396 = vmatpush.bf16.msra.mxu0 %v379
      %397 = vmatpush.bf16.msra.mxu0 %v378
      %398 = vmatpush.bf16.msra.mxu0 %v377
      %399 = vmatpush.bf16.msra.mxu0 %v376
      %400 = vmatmul.bf16.gmra.mxu0 %v342
      %v401 = vpop.f32.mrf.mxu0
      %v402 = vadd.f32 0.0, %v401
      %v403 = vpop.f32.mrf.mxu0
      %v404 = vadd.f32 0.0, %v403
      %405 = vdwg.mxu0
      %v406 = vadd.f32 %v313, %v402
      %v407 = vadd.f32 %v315, %v404
      %408 = vst.msk [vmem:[#allocation7] sm:$0xff] %vm149, %v406
      %409 = vst.msk [vmem:[#allocation7 + $0x8] sm:$0xff] %vm149, %v407
    $region37: #{tpu_custom_call.1} parent=1 // pred_fallthru
      _
    // Predicated region
    $region38: #{tpu_custom_call.1} parent=1 // pred_check
      _
    $region39: #{tpu_custom_call.1} parent=1 // pred_check_branch
      %411 = sbr.rel (0) target = $region41
    $region40: #{tpu_custom_call.1} parent=1 // pred_region
      %413 = vsyncadd [#allocation6], 0
      %s414 = sshll.u32 [#allocation7], 4
      %s415 = int_to_ptr.vmem [resolvable:$true] %s414
      %s416 = sshll.u32 %s6, 4
      %s417 = int_to_ptr.hbm [resolvable:$true] %s416
      %422 = dma.vmem_to_hbm [thread:$0]  %s415, 256, %s417, [#allocation6], 128, 128, 8
    $region41: #{tpu_custom_call.1} parent=1 // pred_fallthru
      _
    // Predicated region
    $region42: #{tpu_custom_call.1} parent=1 // pred_check
      _
    $region43: #{tpu_custom_call.1} parent=1 // pred_check_branch
      %424 = sbr.rel (0) target = $region45
    $region44: #{tpu_custom_call.1} parent=1 // pred_region
      %426 = dma.done [#allocation6], 256
    $region45: #{tpu_custom_call.1} parent=1 // pred_fallthru
      _
    %427 = vsyncpa [#allocation5], 1
    %428 = vsyncpa [#allocation6], 1

</llo_original>
